<compile_context>
chip_gen: v6e
topology: v6e:2x2x1
jax: 0.10.0
libtpu: 0.0.40
codegen_flags: <defaults>
</compile_context>

<pallas_src>
import functools

import jax
import jax.numpy as jnp
import numpy as np
from jax.experimental import pallas as pl
from jax.experimental.pallas import tpu as pltpu


# ---------------------------------------------------------------------------
# Deterministic parameter setup (mirrors BicubicDownSample.__init__)
# ---------------------------------------------------------------------------
def bicubic_kernel_scalar(x, a=-0.5):
    ax = abs(x)
    if ax <= 1.0:
        return (a + 2.0) * ax**3 - (a + 3.0) * ax**2 + 1.0
    elif 1.0 < ax < 2.0:
        return a * ax**3 - 5.0 * a * ax**2 + 8.0 * a * ax - 4.0 * a
    else:
        return 0.0


def make_bicubic_taps(factor=4):
    size = factor * 4
    k = np.array(
        [bicubic_kernel_scalar((i - np.floor(size / 2) + 0.5) / factor) for i in range(size)],
        dtype=np.float32,
    )
    return k / k.sum()  # shape (factor*4,)


def make_downsample_matrix(taps, n_pad, n_out, stride):
    """A[i, i*stride + j] = taps[j]  -> out[i] = sum_j taps[j] * x_pad[i*stride + j]."""
    size = taps.shape[0]
    A = np.zeros((n_out, n_pad), dtype=np.float32)
    for i in range(n_out):
        A[i, i * stride : i * stride + size] = taps
    return A


def make_reflect_matrix(n, pad_lo, pad_hi):
    """R (n_pad, n) with x_pad = R @ x, PyTorch/jnp 'reflect' (edge not repeated)."""
    n_pad = n + pad_lo + pad_hi
    R = np.zeros((n_pad, n), dtype=np.float32)
    for p in range(n_pad):
        i = p - pad_lo
        if i < 0:
            i = -i
        elif i >= n:
            i = 2 * (n - 1) - i
        R[p, i] = 1.0
    return R


def _round_up(v, m):
    return ((v + m - 1) // m) * m


def _pick_tb(nc, h, w, hout_p, wout_p, cd_bytes, budget=24 * 1024 * 1024):
    """Planes per grid step: fill the VMEM budget (safe on v7x's 64 MiB/TC),
    keep >=2 grid steps so both v7x TensorCores get work, limit unroll."""
    fixed = 2 * (hout_p * h + w * wout_p) * cd_bytes            # A', B' (double-buffered)
    per = (2 * h * w * cd_bytes                                  # x block, double-buffered
           + 2 * hout_p * wout_p * 4                             # out block, double-buffered (f32)
           + h * wout_p * (4 + cd_bytes))                        # intermediate
    tb_max = max(1, int((budget - fixed) // per))
    tb_max = min(tb_max, 16)                                     # bound in-kernel unroll
    if nc >= 2:
        tb_max = min(tb_max, -(-nc // 2))                        # >= 2 grid steps
    tb = 1
    for d in range(1, tb_max + 1):                               # largest divisor of nc <= tb_max
        if nc % d == 0:
            tb = d
    return tb


# ---------------------------------------------------------------------------
# Pallas kernel: TB planes per step, out[t] = A' @ (x[t] @ B')
# ---------------------------------------------------------------------------
def _bicubic_ds_kernel(a_ref, b_ref, x_ref, o_ref):
    TB, H, W = x_ref.shape
    Wout_p = b_ref.shape[1]
    cd = x_ref.dtype

    a = a_ref[...]                                   # (Hout_p, H)
    b = b_ref[...]                                   # (W, Wout_p)
    x = x_ref[...]                                   # (TB, H, W)

    if H % 8 == 0:
        # Horizontal pass for all TB planes as one big-M matmul.
        xh_all = jnp.dot(x.reshape(TB * H, W), b,
                         preferred_element_type=jnp.float32)     # (TB*H, Wout_p) f32
        xh_all = xh_all.reshape(TB, H, Wout_p).astype(cd)
    else:
        xh_all = None

    for t in range(TB):                              # static unroll (TB small)
        if xh_all is not None:
            ht = xh_all[t]                           # (H, Wout_p)
        else:
            ht = jnp.dot(x[t], b, preferred_element_type=jnp.float32).astype(cd)
        # Vertical pass (per plane): (Hout_p, H) @ (H, Wout_p)
        o_ref[t] = jnp.dot(a, ht, preferred_element_type=jnp.float32).astype(o_ref.dtype)


def bicubic_downsample(x, factor=4, padding="reflect", compute_dtype=jnp.bfloat16):
    """x: (N, C, H, W) float. Same math as BicubicDownSample.forward defaults
    (nhwc=False, clip_round=False, byte_output=False). Output float32."""
    assert padding == "reflect", "only 'reflect' padding implemented"
    N, C, H, W = x.shape
    filt = factor * 4
    stride = factor
    pad = filt - stride
    pad_lo, pad_hi = pad // 2, pad - pad // 2
    assert H > max(pad_lo, pad_hi) and W > max(pad_lo, pad_hi), "reflect pad needs pad < dim"

    Hp, Wp = H + pad, W + pad
    Hout = (Hp - filt) // stride + 1
    Wout = (Wp - filt) // stride + 1

    taps = make_bicubic_taps(factor)
    A = make_downsample_matrix(taps, Hp, Hout, stride)            # (Hout, Hp)
    Bm = make_downsample_matrix(taps, Wp, Wout, stride).T         # (Wp, Wout)
    Rh = make_reflect_matrix(H, pad_lo, pad_hi)                   # (Hp, H)
    Rw = make_reflect_matrix(W, pad_lo, pad_hi)                   # (Wp, W)
    A_f = A @ Rh                                                  # (Hout, H)  pad folded in
    B_f = Rw.T @ Bm                                               # (W, Wout)  pad folded in

    # Pad output dims to (8, 128)-aligned with zero rows/cols (lane-dense stores).
    Hout_p = _round_up(Hout, 8)
    Wout_p = _round_up(Wout, 128)
    A_f = np.pad(A_f, ((0, Hout_p - Hout), (0, 0)))
    B_f = np.pad(B_f, ((0, 0), (0, Wout_p - Wout)))

    cd = jnp.dtype(compute_dtype)
    A_d = jnp.asarray(A_f, dtype=cd)
    B_d = jnp.asarray(B_f, dtype=cd)
    NC = N * C
    x_flat = x.reshape(NC, H, W).astype(cd)

    TB = _pick_tb(NC, H, W, Hout_p, Wout_p, cd.itemsize)
    grid = (NC // TB,)

    flops = int(2 * NC * (H * W * Wout_p + Hout_p * H * Wout_p))
    bytes_accessed = int(
        NC * H * W * cd.itemsize + A_d.size * cd.itemsize + B_d.size * cd.itemsize
        + NC * Hout_p * Wout_p * 4
    )

    out_flat = pl.pallas_call(
        _bicubic_ds_kernel,
        out_shape=jax.ShapeDtypeStruct((NC, Hout_p, Wout_p), jnp.float32),
        grid_spec=pltpu.PrefetchScalarGridSpec(
            num_scalar_prefetch=0,
            grid=grid,
            in_specs=[
                pl.BlockSpec((Hout_p, H), lambda i: (0, 0)),      # A' resident
                pl.BlockSpec((W, Wout_p), lambda i: (0, 0)),      # B' resident
                pl.BlockSpec((TB, H, W), lambda i: (i, 0, 0)),    # TB planes / step
            ],
            out_specs=pl.BlockSpec((TB, Hout_p, Wout_p), lambda i: (i, 0, 0)),
        ),
        compiler_params=pltpu.CompilerParams(
            dimension_semantics=("parallel",),
            vmem_limit_bytes=48 * 1024 * 1024,                    # fits v7x 64 MiB/TC
        ),
        cost_estimate=pl.CostEstimate(
            flops=flops, transcendentals=0, bytes_accessed=bytes_accessed
        ),
    )(A_d, B_d, x_flat)

    if Hout_p != Hout or Wout_p != Wout:
        out_flat = out_flat[:, :Hout, :Wout]

    # TODO(synk): clip_round / byte_output / nhwc options of forward() are not
    # implemented (defaults are False); clip_round between the two convs would
    # require splitting the fused two-matmul formulation.
    return out_flat.reshape(N, C, Hout, Wout)


# ---------------------------------------------------------------------------
# Pure-JAX f32 reference (explicit reflect pad) — validates the folded-pad
# matrices against PyTorch/jnp 'reflect' semantics.
# ---------------------------------------------------------------------------
def bicubic_downsample_ref(x, factor=4):
    N, C, H, W = x.shape
    filt = factor * 4
    stride = factor
    pad = filt - stride
    pad_lo, pad_hi = pad // 2, pad - pad // 2
    x_pad = jnp.pad(x, ((0, 0), (0, 0), (pad_lo, pad_hi), (pad_lo, pad_hi)), mode="reflect")
    Hp, Wp = H + pad, W + pad
    Hout = (Hp - filt) // stride + 1
    Wout = (Wp - filt) // stride + 1
    taps = make_bicubic_taps(factor)
    A = jnp.asarray(make_downsample_matrix(taps, Hp, Hout, stride))
    B = jnp.asarray(make_downsample_matrix(taps, Wp, Wout, stride).T)
    return jnp.einsum("oh,nchw,wp->ncop", A, x_pad, B)


if __name__ == "__main__":
    key = jax.random.PRNGKey(0)
    # The PyTorch module's depthwise filters are built for 3-channel (RGB) input.
    N, C, H, W = 2, 3, 16, 16
    x = jax.random.uniform(key, (N, C, H, W), dtype=jnp.float32) * 255.0

    out = bicubic_downsample(x, factor=4)
    out = jax.block_until_ready(out)

    ref = bicubic_downsample_ref(x, factor=4)
    assert out.shape == (N, C, H // 4, W // 4), out.shape
    # bf16 operands (f32 MXU accumulation): allow ~1.2% of the 0..255 range.
    max_err = float(jnp.max(jnp.abs(out - ref)))
    assert max_err < 3.0, f"mismatch vs reference (max abs err {max_err})"

    print("KERNEL_OK")
</pallas_src>

<mosaic_0001>
module attributes {stable_mosaic.version = 11 : i64} {
  func.func @_bicubic_ds_kernel(%arg0: i32, %arg1: memref<8x16xbf16, #tpu.memory_space<vmem>>, %arg2: memref<16x128xbf16, #tpu.memory_space<vmem>>, %arg3: memref<3x16x16xbf16, #tpu.memory_space<vmem>>, %arg4: memref<3x8x128xf32, #tpu.memory_space<vmem>>) attributes {dimension_semantics = [#tpu.dimension_semantics<parallel>], iteration_bounds = array<i64: 2>, scalar_prefetch = 0 : i64, scratch_operands = 0 : i64, tpu.core_type = #tpu.core_type<tc>, window_params = [{pipeline_mode = #tpu.pipeline_mode<synchronous>, transform_indices = @transform_0, window_bounds = array<i64: 8, 16>}, {pipeline_mode = #tpu.pipeline_mode<synchronous>, transform_indices = @transform_1, window_bounds = array<i64: 16, 128>}, {transform_indices = @transform_2, window_bounds = array<i64: 3, 16, 16>}, {transform_indices = @transform_3, window_bounds = array<i64: 3, 8, 128>}]} {
    %c0 = arith.constant 0 : index
    %c0_0 = arith.constant 0 : index
    %0 = vector.load %arg1[%c0, %c0_0] : memref<8x16xbf16, #tpu.memory_space<vmem>>, vector<8x16xbf16>
    %c0_1 = arith.constant 0 : index
    %c0_2 = arith.constant 0 : index
    %1 = vector.load %arg2[%c0_1, %c0_2] : memref<16x128xbf16, #tpu.memory_space<vmem>>, vector<16x128xbf16>
    %c0_3 = arith.constant 0 : index
    %c0_4 = arith.constant 0 : index
    %c0_5 = arith.constant 0 : index
    %2 = vector.load %arg3[%c0_3, %c0_4, %c0_5] : memref<3x16x16xbf16, #tpu.memory_space<vmem>>, vector<3x16x16xbf16>
    %3 = vector.shape_cast %2 : vector<3x16x16xbf16> to vector<48x16xbf16>
    %cst = arith.constant dense<0.000000e+00> : vector<48x128xf32>
    %4 = tpu.matmul %3, %1, %cst {dimension_numbers = #tpu.dot_dimension_numbers<[1], [0], [0], [1], [0, 0, 1, 1], [], []>} : vector<48x16xbf16>, vector<16x128xbf16>, vector<48x128xf32> -> vector<48x128xf32>
    %5 = vector.shape_cast %4 : vector<48x128xf32> to vector<3x16x128xf32>
    %6 = arith.truncf %5 : vector<3x16x128xf32> to vector<3x16x128xbf16>
    %7 = vector.extract_strided_slice %6 {offsets = [0, 0, 0], sizes = [1, 16, 128], strides = [1, 1, 1]} : vector<3x16x128xbf16> to vector<1x16x128xbf16>
    %8 = vector.shape_cast %7 : vector<1x16x128xbf16> to vector<16x128xbf16>
    %cst_6 = arith.constant dense<0.000000e+00> : vector<8x128xf32>
    %9 = tpu.matmul %0, %8, %cst_6 {dimension_numbers = #tpu.dot_dimension_numbers<[1], [0], [0], [1], [0, 0, 1, 1], [], []>} : vector<8x16xbf16>, vector<16x128xbf16>, vector<8x128xf32> -> vector<8x128xf32>
    %c0_7 = arith.constant 0 : index
    %c0_8 = arith.constant 0 : index
    %c0_9 = arith.constant 0 : index
    %10 = vector.load %arg4[%c0_7, %c0_8, %c0_9] : memref<3x8x128xf32, #tpu.memory_space<vmem>>, vector<1x8x128xf32>
    %11 = vector.shape_cast %10 : vector<1x8x128xf32> to vector<8x128xf32>
    %12 = vector.shape_cast %9 : vector<8x128xf32> to vector<1x8x128xf32>
    tpu.vector_store %arg4[%c0_7, %c0_8, %c0_9], %12 {strides = array<i32>} : memref<3x8x128xf32, #tpu.memory_space<vmem>>, vector<1x8x128xf32>,
    %13 = vector.extract_strided_slice %6 {offsets = [1, 0, 0], sizes = [1, 16, 128], strides = [1, 1, 1]} : vector<3x16x128xbf16> to vector<1x16x128xbf16>
    %14 = vector.shape_cast %13 : vector<1x16x128xbf16> to vector<16x128xbf16>
    %cst_10 = arith.constant dense<0.000000e+00> : vector<8x128xf32>
    %15 = tpu.matmul %0, %14, %cst_10 {dimension_numbers = #tpu.dot_dimension_numbers<[1], [0], [0], [1], [0, 0, 1, 1], [], []>} : vector<8x16xbf16>, vector<16x128xbf16>, vector<8x128xf32> -> vector<8x128xf32>
    %c1 = arith.constant 1 : index
    %c0_11 = arith.constant 0 : index
    %c0_12 = arith.constant 0 : index
    %16 = vector.load %arg4[%c1, %c0_11, %c0_12] : memref<3x8x128xf32, #tpu.memory_space<vmem>>, vector<1x8x128xf32>
    %17 = vector.shape_cast %16 : vector<1x8x128xf32> to vector<8x128xf32>
    %18 = vector.shape_cast %15 : vector<8x128xf32> to vector<1x8x128xf32>
    tpu.vector_store %arg4[%c1, %c0_11, %c0_12], %18 {strides = array<i32>} : memref<3x8x128xf32, #tpu.memory_space<vmem>>, vector<1x8x128xf32>,
    %19 = vector.extract_strided_slice %6 {offsets = [2, 0, 0], sizes = [1, 16, 128], strides = [1, 1, 1]} : vector<3x16x128xbf16> to vector<1x16x128xbf16>
    %20 = vector.shape_cast %19 : vector<1x16x128xbf16> to vector<16x128xbf16>
    %cst_13 = arith.constant dense<0.000000e+00> : vector<8x128xf32>
    %21 = tpu.matmul %0, %20, %cst_13 {dimension_numbers = #tpu.dot_dimension_numbers<[1], [0], [0], [1], [0, 0, 1, 1], [], []>} : vector<8x16xbf16>, vector<16x128xbf16>, vector<8x128xf32> -> vector<8x128xf32>
    %c2 = arith.constant 2 : index
    %c0_14 = arith.constant 0 : index
    %c0_15 = arith.constant 0 : index
    %22 = vector.load %arg4[%c2, %c0_14, %c0_15] : memref<3x8x128xf32, #tpu.memory_space<vmem>>, vector<1x8x128xf32>
    %23 = vector.shape_cast %22 : vector<1x8x128xf32> to vector<8x128xf32>
    %24 = vector.shape_cast %21 : vector<8x128xf32> to vector<1x8x128xf32>
    tpu.vector_store %arg4[%c2, %c0_14, %c0_15], %24 {strides = array<i32>} : memref<3x8x128xf32, #tpu.memory_space<vmem>>, vector<1x8x128xf32>,
    return
  }
  func.func @transform_0(%arg0: i32) -> (i32, i32) {
    %c0_i32 = arith.constant 0 : i32
    %c0_i32_0 = arith.constant 0 : i32
    %c0_i32_1 = arith.constant 0 : i32
    return %c0_i32, %c0_i32_0 : i32, i32
  }
  func.func @transform_1(%arg0: i32) -> (i32, i32) {
    %c0_i32 = arith.constant 0 : i32
    %c0_i32_0 = arith.constant 0 : i32
    %c0_i32_1 = arith.constant 0 : i32
    return %c0_i32, %c0_i32_0 : i32, i32
  }
  func.func @transform_2(%arg0: i32) -> (i32, i32, i32) {
    %c0_i32 = arith.constant 0 : i32
    %c0_i32_0 = arith.constant 0 : i32
    %c0_i32_1 = arith.constant 0 : i32
    return %arg0, %c0_i32, %c0_i32_0 : i32, i32, i32
  }
  func.func @transform_3(%arg0: i32) -> (i32, i32, i32) {
    %c0_i32 = arith.constant 0 : i32
    %c0_i32_0 = arith.constant 0 : i32
    %c0_i32_1 = arith.constant 0 : i32
    return %arg0, %c0_i32, %c0_i32_0 : i32, i32, i32
  }
}

</mosaic_0001>

<llo_original>
// kernel: tpu_custom_call.1
$region0: #{tpu_custom_call.1}
  #allocation0 [shape = 'u32[]', space=smem, size = 0x4, offset = 0x4, fixed_abs, tag = 'smem constant byte address 0x4 - core index']
  #allocation1 [shape = 'u32[144,128]{1,0:T(1,128)}', space=vmem, size = 0x12000, scoped, tag = 'internal scratch']
  %s0 = inlined_call_operand.hbm [shape: bf16[8,16], index: 0, kind: input, shape index: {}]
  %s1 = inlined_call_operand.hbm [shape: bf16[16,128], index: 1, kind: input, shape index: {}]
  %s2 = inlined_call_operand.hbm [shape: bf16[6,16,16], index: 2, kind: input, shape index: {}]
  %s3 = inlined_call_operand.hbm [shape: f32[6,8,128], index: 3, kind: output, shape index: {}]
  %s4 = sld [smem:[#allocation0]]
  $region57: #{tpu_custom_call.1} parent=0
    _
  %s6 = ssub.s32 1, %s4
  %s7 = scalar_select 0, %s6, %s4
  $region1: #{tpu_custom_call.1} parent=0
    #allocation2 [shape = 'u8[2048]{0}', space=vmem, size = 0x800, scoped, tag = 'input window, operand 0, single buffered']
    #allocation3 [shape = 's32[2]{0}', space=sflag, size = 0x8, scoped, tag = 'scoped memory for tpu_custom_call.1']
    #allocation4 [shape = 's32[2]{0}', space=sflag, size = 0x8, scoped, tag = 'scoped memory for tpu_custom_call.1']
    #allocation5 [shape = 'u8[4096]{0}', space=vmem, size = 0x1000, scoped, tag = 'input window, operand 1, single buffered']
    #allocation6 [shape = 's32[1]{0}', space=sflag, size = 0x4, scoped, tag = 'scoped memory for tpu_custom_call.1']
    #allocation7 [shape = 'u8[24576]{0}', space=vmem, size = 0x6000, scoped, tag = 'input window, operand 2']
    #allocation8 [shape = 'u8[24576]{0}', space=vmem, size = 0x6000, scoped, tag = 'output window, operand 0']
    %8 = vsyncpa [#allocation3], 0
    %9 = vsyncpa [#allocation6], 0
    %10 = vsyncpa [#allocation4], 0
    %s11 = scalar_lea.sflag [#allocation4], 1
    %12 = vsyncpa %s11, 0
    loop: start=0, step=1, limit=4
    $region2: #{tpu_custom_call.1} parent=1 // loop_pre_header
      _
    $region3: #{tpu_custom_call.1} parent=1 // loop_header
      %s14 = sphi 0, %s18
      %p15 = scmp.ge.s32.totalorder %s14, 4
      %s22 = sphi 0, %s22
      %s24 = sphi 0, %s22
      %s25 = sphi 0, %s24
      %s39 = sphi 0, %s25
      %s43 = sphi 0, %s43
      %s45 = sphi 0, %s43
      %s46 = sphi 0, %s45
      %s60 = sphi 0, %s46
      %s66 = sphi 0, %s68
      %s69 = sphi 0, %s66
      %s70 = sphi 0, %s69
      %s86 = sphi 0, %s70
      %s92 = sphi 0, %s94
      %s95 = sphi 0, %s92
      %s96 = sphi 0, %s95
      %s112 = sphi 0, %s96
    $region4: #{tpu_custom_call.1} parent=1 // loop_header_branch
      %17 = sbr.rel (%p15) target = $region8
    $region5: #{tpu_custom_call.1} parent=1 // loop_body
      %s19 = ssub.s32 %s14, 1
      %s20 = ssub.s32 %s14, 2
      %s21 = sadd.s32 %s14, 1
      %s23 = sadd.s32 %s22, 1
      %p26 = scmp.eq.s32.totalorder %s14, 1
      %p27 = scmp.ne.s32.totalorder %s22, %s24
      %p28 = scmp.eq.s32.totalorder %s14, 0
      %p29 = por %p27, %p28
      %p30 = scmp.ne.s32.totalorder %s22, %s24
      %p31 = scmp.eq.s32.totalorder %s19, 1
      %p32 = por %p30, %p31
      %p33 = scmp.ne.s32.totalorder %s24, %s25
      %p34 = scmp.eq.s32.totalorder %s19, 0
      %p35 = por %p33, %p34
      %p36 = scmp.ne.s32.totalorder %s24, %s25
      %p37 = scmp.eq.s32.totalorder %s20, 1
      %p38 = por %p36, %p37
      %p40 = scmp.ne.s32.totalorder %s25, %s39
      %p41 = scmp.eq.s32.totalorder %s20, 0
      %p42 = por %p40, %p41
      %s44 = sadd.s32 %s43, 1
      %p47 = scmp.eq.s32.totalorder %s14, 1
      %p48 = scmp.ne.s32.totalorder %s43, %s45
      %p49 = scmp.eq.s32.totalorder %s14, 0
      %p50 = por %p48, %p49
      %p51 = scmp.ne.s32.totalorder %s43, %s45
      %p52 = scmp.eq.s32.totalorder %s19, 1
      %p53 = por %p51, %p52
      %p54 = scmp.ne.s32.totalorder %s45, %s46
      %p55 = scmp.eq.s32.totalorder %s19, 0
      %p56 = por %p54, %p55
      %p57 = scmp.ne.s32.totalorder %s45, %s46
      %p58 = scmp.eq.s32.totalorder %s20, 1
      %p59 = por %p57, %p58
      %p61 = scmp.ne.s32.totalorder %s46, %s60
      %p62 = scmp.eq.s32.totalorder %s20, 0
      %p63 = por %p61, %p62
      %s64 = ssub.s32 %s14, %s21
      %p65 = scmp.eq.s32.totalorder %s64, 0
      %s67 = sadd.s32 %s66, 1
      %s68 = scalar_select %p65, %s66, %s67
      %p71 = pneg %p65
      %p72 = scmp.eq.s32.totalorder %s14, 1
      %p73 = por %p71, %p72
      %p74 = scmp.ne.s32.totalorder %s66, %s69
      %p75 = scmp.eq.s32.totalorder %s14, 0
      %p76 = por %p74, %p75
      %p77 = scmp.ne.s32.totalorder %s66, %s69
      %p78 = scmp.eq.s32.totalorder %s19, 1
      %p79 = por %p77, %p78
      %p80 = scmp.ne.s32.totalorder %s69, %s70
      %p81 = scmp.eq.s32.totalorder %s19, 0
      %p82 = por %p80, %p81
      %p83 = scmp.ne.s32.totalorder %s69, %s70
      %p84 = scmp.eq.s32.totalorder %s20, 1
      %p85 = por %p83, %p84
      %p87 = scmp.ne.s32.totalorder %s70, %s86
      %p88 = scmp.eq.s32.totalorder %s20, 0
      %p89 = por %p87, %p88
      %s90 = ssub.s32 %s14, %s21
      %p91 = scmp.eq.s32.totalorder %s90, 0
      %s93 = sadd.s32 %s92, 1
      %s94 = scalar_select %p91, %s92, %s93
      %p97 = pneg %p91
      %p98 = scmp.eq.s32.totalorder %s14, 1
      %p99 = por %p97, %p98
      %p100 = scmp.ne.s32.totalorder %s92, %s95
      %p101 = scmp.eq.s32.totalorder %s14, 0
      %p102 = por %p100, %p101
      %p103 = scmp.ne.s32.totalorder %s92, %s95
      %p104 = scmp.eq.s32.totalorder %s19, 1
      %p105 = por %p103, %p104
      %p106 = scmp.ne.s32.totalorder %s95, %s96
      %p107 = scmp.eq.s32.totalorder %s19, 0
      %p108 = por %p106, %p107
      %p109 = scmp.ne.s32.totalorder %s95, %s96
      %p110 = scmp.eq.s32.totalorder %s20, 1
      %p111 = por %p109, %p110
      %p113 = scmp.ne.s32.totalorder %s96, %s112
      %p114 = scmp.eq.s32.totalorder %s20, 0
      %p115 = por %p113, %p114
      %p116 = scmp.le.s32.totalorder 1, %s14
      %p117 = scmp.lt.s32.totalorder %s14, 3
      %p118 = pnand %p116, %p117
      %p119 = pneg %p118
      // Predicated region
      $region9: #{tpu_custom_call.1} parent=5 // pred_check
        _
      $region10: #{tpu_custom_call.1} parent=5 // pred_check_branch
        %121 = sbr.rel (%p118) target = $region12
      $region11: #{tpu_custom_call.1} parent=5 // pred_region
        %s122 = ssub.s32 %s14, 1
        // Predicated region
        $region13: #{tpu_custom_call.1} parent=11 // pred_check
          %p123 = pneg %p35
        $region14: #{tpu_custom_call.1} parent=11 // pred_check_branch
          %125 = sbr.rel (%p123) target = $region16
        $region15: #{tpu_custom_call.1} parent=11 // pred_region
          %s127 = ssub.s32 64, 64
          %128 = vsyncadd [#allocation3], %s127
          %s130 = sshll.u32 [#allocation2], 4
          %s131 = int_to_ptr.vmem [resolvable:$true] %s130
          %133 = dma.hbm_to_vmem [thread:$0]  %s0, 64, %s131, [#allocation3]
        $region16: #{tpu_custom_call.1} parent=11 // pred_fallthru
          _
        // Predicated region
        $region17: #{tpu_custom_call.1} parent=11 // pred_check
          %p134 = pneg %p56
        $region18: #{tpu_custom_call.1} parent=11 // pred_check_branch
          %136 = sbr.rel (%p134) target = $region20
        $region19: #{tpu_custom_call.1} parent=11 // pred_region
          %s138 = ssub.s32 128, 128
          %139 = vsyncadd [#allocation6], %s138
          %s140 = sshll.u32 [#allocation5], 4
          %s141 = int_to_ptr.vmem [resolvable:$true] %s140
          %146 = dma.hbm_to_vmem [thread:$0]  %s1, 128, %s141, [#allocation6], 64, 64, 4
        $region20: #{tpu_custom_call.1} parent=11 // pred_fallthru
          _
      $region12: #{tpu_custom_call.1} parent=5 // pred_fallthru
        _
      %p147 = scmp.lt.s32.totalorder %s14, 2
      // Predicated region
      $region21: #{tpu_custom_call.1} parent=5 // pred_check
        %p148 = pneg %p147
      $region22: #{tpu_custom_call.1} parent=5 // pred_check_branch
        %150 = sbr.rel (%p148) target = $region24
      $region23: #{tpu_custom_call.1} parent=5 // pred_region
        // Predicated region
        $region25: #{tpu_custom_call.1} parent=23 // pred_check
          %p151 = pneg %p76
        $region26: #{tpu_custom_call.1} parent=23 // pred_check_branch
          %153 = sbr.rel (%p151) target = $region28
        $region27: #{tpu_custom_call.1} parent=23 // pred_region
          %s154 = sand.u32 %s14, 1
          %s155 = scalar_lea.sflag [#allocation3], %s154
          %s156 = sand.u32 %s66, 1
          %s157 = smul.addr %s156, 24
          %s158 = scalar_lea.vmem [#allocation7], %s157
          %s159 = smul.u32 3, %s14
          %s161 = ssub.s32 384, 384
          %162 = vsyncadd %s155, %s161
          %s163 = smul.addr %s159, 2
          %s164 = smul.addr %s163, 64
          %s165 = scalar_lea.hbm %s2, %s164
          %s166 = sshll.u32 %s158, 4
          %s167 = int_to_ptr.vmem [resolvable:$true] %s166
          %172 = dma.hbm_to_vmem [thread:$0]  %s165, 384, %s167, %s155, 64, 64, 4
        $region28: #{tpu_custom_call.1} parent=23 // pred_fallthru
          _
      $region24: #{tpu_custom_call.1} parent=5 // pred_fallthru
        _
      %p173 = scmp.le.s32.totalorder 1, %s14
      %p174 = scmp.lt.s32.totalorder %s14, 3
      %p175 = pnand %p173, %p174
      %p176 = pneg %p175
      // Predicated region
      $region29: #{tpu_custom_call.1} parent=5 // pred_check
        _
      $region30: #{tpu_custom_call.1} parent=5 // pred_check_branch
        %178 = sbr.rel (%p175) target = $region32
      $region31: #{tpu_custom_call.1} parent=5 // pred_region
        %s179 = ssub.s32 %s14, 1
        // Predicated region
        $region33: #{tpu_custom_call.1} parent=31 // pred_check
          %p180 = pneg %p35
        $region34: #{tpu_custom_call.1} parent=31 // pred_check_branch
          %182 = sbr.rel (%p180) target = $region36
        $region35: #{tpu_custom_call.1} parent=31 // pred_region
          %183 = dma.done [#allocation3], 64
        $region36: #{tpu_custom_call.1} parent=31 // pred_fallthru
          _
        // Predicated region
        $region37: #{tpu_custom_call.1} parent=31 // pred_check
          %p184 = pneg %p56
        $region38: #{tpu_custom_call.1} parent=31 // pred_check_branch
          %186 = sbr.rel (%p184) target = $region40
        $region39: #{tpu_custom_call.1} parent=31 // pred_region
          %187 = dma.done [#allocation6], 128
        $region40: #{tpu_custom_call.1} parent=31 // pred_fallthru
          _
        %s188 = sand.u32 %s19, 1
        %s189 = scalar_lea.sflag [#allocation3], %s188
        %s190 = sand.u32 %s69, 1
        %s191 = smul.addr %s190, 24
        %s192 = scalar_lea.vmem [#allocation7], %s191
        // Predicated region
        $region41: #{tpu_custom_call.1} parent=31 // pred_check
          %p193 = pneg %p82
        $region42: #{tpu_custom_call.1} parent=31 // pred_check_branch
          %195 = sbr.rel (%p193) target = $region44
        $region43: #{tpu_custom_call.1} parent=31 // pred_region
          %196 = dma.done %s189, 384
        $region44: #{tpu_custom_call.1} parent=31 // pred_fallthru
          _
        %p197 = pneg %p35
        %p198 = pneg %p32
        %p199 = pneg %p56
        %p200 = pneg %p53
        %s201 = sand.u32 %s19, 1
        %s202 = scalar_lea.sflag [#allocation3], %s201
        %s203 = sand.u32 %s69, 1
        %s204 = smul.addr %s203, 24
        %s205 = scalar_lea.vmem [#allocation7], %s204
        %p206 = pneg %p82
        %p207 = pneg %p79
        %p208 = pneg %p108
        %p209 = pneg %p105
        %s210 = sand.u32 %s95, 1
        %s211 = scalar_lea.sflag [#allocation4], %s210
        %s212 = sand.u32 %s95, 1
        %s213 = smul.addr %s212, 24
        %s214 = scalar_lea.vmem [#allocation8], %s213
        %s215 = smul.u32 3, %s19
        %s216 = smul.u32 3, %s19
        %v218 = vld [vmem:[#allocation2] sm:$0xf]
        %v219 = vld [vmem:[#allocation5] sm:$0xf]
        %v220 = vld [vmem:[#allocation5 + $0x4] sm:$0xf]
        %v221 = vld [vmem:[%s192] sm:$0xf]
        %v222 = vld [vmem:[%s192 + $0x4] sm:$0xf]
        %v223 = vld [vmem:[%s192 + $0x8] sm:$0xf]
        %v224 = vld [vmem:[%s192 + $0xc] sm:$0xf]
        %v225 = vld [vmem:[%s192 + $0x10] sm:$0xf]
        %v226 = vld [vmem:[%s192 + $0x14] sm:$0xf]
        %v233 = vunpack.c.l.b16 %v221
        %v234 = vunpack.c.l.b16 %v222
        %v235 = vunpack.c.l.b16 %v223
        %v236 = vunpack.c.l.b16 %v224
        %v237 = vunpack.c.l.b16 %v225
        %v238 = vunpack.c.l.b16 %v226
        %v239 = vpack.c.b16 %v234, %v233
        %v240 = vpack.c.b16 %v236, %v235
        %v241 = vpack.c.b16 %v238, %v237
        %v244 = vunpack.c.l.b16 %v219
        %v245 = vunpack.c.l.b16 %v220
        %v246 = vpack.c.b16 %v245, %v244
        %vm248 = vcmask 130048
        %v250 = vsel %vm248, %v239, 0
        %v253 = vsel %vm248, %v240, 0
        %v256 = vsel %vm248, %v241, 0
        %258 = vmatprep.subr.bf16.mxu0 0
        %259 = vmatpush1.bf16.msra.mxu0 0
        %260 = vmatprep.subr.bf16.mxu0 0
        %261 = vmatpush1.bf16.msra.mxu0 0
        %262 = vmatprep.subr.bf16.mxu0 0
        %263 = vmatpush1.bf16.msra.mxu0 0
        %264 = vmatprep.subr.bf16.mxu0 0
        %265 = vmatpush1.bf16.msra.mxu0 0
        %266 = vmatprep.subr.bf16.mxu0 0
        %267 = vmatpush1.bf16.msra.mxu0 0
        %268 = vmatprep.subr.bf16.mxu0 0
        %269 = vmatpush1.bf16.msra.mxu0 0
        %270 = vmatprep.subr.bf16.mxu0 0
        %271 = vmatpush1.bf16.msra.mxu0 0
        %272 = vmatprep.subr.bf16.mxu0 0
        %273 = vmatpush1.bf16.msra.mxu0 %v246
        %274 = vmatprep.subr.bf16.mxu0 0
        %275 = vmatpush2.bf16.msra.mxu0 0
        %276 = vmatprep.subr.bf16.mxu0 0
        %277 = vmatpush2.bf16.msra.mxu0 0
        %278 = vmatprep.subr.bf16.mxu0 0
        %279 = vmatpush2.bf16.msra.mxu0 0
        %280 = vmatprep.subr.bf16.mxu0 0
        %281 = vmatpush2.bf16.msra.mxu0 0
        %282 = vmatprep.subr.bf16.mxu0 0
        %283 = vmatpush2.bf16.msra.mxu0 0
        %284 = vmatprep.subr.bf16.mxu0 0
        %285 = vmatpush2.bf16.msra.mxu0 0
        %286 = vmatprep.subr.bf16.mxu0 0
        %287 = vmatpush2.bf16.msra.mxu0 0
        %288 = vmatprep.subr.bf16.mxu0 0
        %289 = vmatpush2.bf16.msra.mxu0 0
        %290 = vmatprep.mubr.bf16.mxu0 0
        %291 = vmatmul.mubr.bf16.gmra.mxu0 %v250
        %v292 = vpop.f32.mrf.mxu0
        %v293 = vadd.f32 0.0, %v292
        %v294 = vpop.f32.mrf.mxu0
        %v295 = vpop.f32.mrf.mxu0
        %v296 = vadd.f32 0.0, %v295
        %v297 = vpop.f32.mrf.mxu0
        %298 = vmatprep.mubr.bf16.mxu0 0
        %299 = vmatmul.mubr.bf16.gmra.mxu0 %v253
        %v300 = vpop.f32.mrf.mxu0
        %v301 = vadd.f32 0.0, %v300
        %v302 = vpop.f32.mrf.mxu0
        %v303 = vpop.f32.mrf.mxu0
        %v304 = vadd.f32 0.0, %v303
        %v305 = vpop.f32.mrf.mxu0
        %306 = vmatprep.mubr.bf16.mxu0 0
        %307 = vmatmul.mubr.bf16.gmra.mxu0 %v256
        %v308 = vpop.f32.mrf.mxu0
        %v309 = vadd.f32 0.0, %v308
        %v310 = vpop.f32.mrf.mxu0
        %v311 = vpop.f32.mrf.mxu0
        %v312 = vadd.f32 0.0, %v311
        %v313 = vpop.f32.mrf.mxu0
        %314 = vdwg.mxu0
        %v315 = vpack.c.bf16 %v296, %v293
        %v316 = vpack.c.bf16 %v304, %v301
        %v317 = vpack.c.bf16 %v312, %v309
        %v319 = vsel %vm248, %v218, 0
        %321 = vmatprep.subr.bf16.mxu0 0
        %322 = vmatpush1.bf16.msra.mxu0 0
        %323 = vmatprep.subr.bf16.mxu0 0
        %324 = vmatpush1.bf16.msra.mxu0 0
        %325 = vmatprep.subr.bf16.mxu0 0
        %326 = vmatpush1.bf16.msra.mxu0 0
        %327 = vmatprep.subr.bf16.mxu0 0
        %328 = vmatpush1.bf16.msra.mxu0 0
        %329 = vmatprep.subr.bf16.mxu0 0
        %330 = vmatpush1.bf16.msra.mxu0 0
        %331 = vmatprep.subr.bf16.mxu0 0
        %332 = vmatpush1.bf16.msra.mxu0 0
        %333 = vmatprep.subr.bf16.mxu0 0
        %334 = vmatpush1.bf16.msra.mxu0 0
        %335 = vmatprep.subr.bf16.mxu0 0
        %336 = vmatpush1.bf16.msra.mxu0 %v315
        %337 = vmatprep.subr.bf16.mxu0 0
        %338 = vmatpush2.bf16.msra.mxu0 0
        %339 = vmatprep.subr.bf16.mxu0 0
        %340 = vmatpush2.bf16.msra.mxu0 0
        %341 = vmatprep.subr.bf16.mxu0 0
        %342 = vmatpush2.bf16.msra.mxu0 0
        %343 = vmatprep.subr.bf16.mxu0 0
        %344 = vmatpush2.bf16.msra.mxu0 0
        %345 = vmatprep.subr.bf16.mxu0 0
        %346 = vmatpush2.bf16.msra.mxu0 0
        %347 = vmatprep.subr.bf16.mxu0 0
        %348 = vmatpush2.bf16.msra.mxu0 0
        %349 = vmatprep.subr.bf16.mxu0 0
        %350 = vmatpush2.bf16.msra.mxu0 0
        %351 = vmatprep.subr.bf16.mxu0 0
        %352 = vmatpush2.bf16.msra.mxu0 0
        %353 = vmatprep.mubr.bf16.mxu0 0
        %354 = vmatmul.mubr.bf16.gmra.mxu0 %v319
        %v355 = vpop.f32.mrf.mxu0
        %v356 = vadd.f32 0.0, %v355
        %v357 = vpop.f32.mrf.mxu0
        %v358 = vpop.f32.mrf.mxu0
        %v359 = vpop.f32.mrf.mxu0
        %360 = vdwg.mxu0
        %361 = vst [vmem:[%s214] sm:$0xff] %v356
        %362 = vmatprep.subr.bf16.mxu0 0
        %363 = vmatpush1.bf16.msra.mxu0 0
        %364 = vmatprep.subr.bf16.mxu0 0
        %365 = vmatpush1.bf16.msra.mxu0 0
        %366 = vmatprep.subr.bf16.mxu0 0
        %367 = vmatpush1.bf16.msra.mxu0 0
        %368 = vmatprep.subr.bf16.mxu0 0
        %369 = vmatpush1.bf16.msra.mxu0 0
        %370 = vmatprep.subr.bf16.mxu0 0
        %371 = vmatpush1.bf16.msra.mxu0 0
        %372 = vmatprep.subr.bf16.mxu0 0
        %373 = vmatpush1.bf16.msra.mxu0 0
        %374 = vmatprep.subr.bf16.mxu0 0
        %375 = vmatpush1.bf16.msra.mxu0 0
        %376 = vmatprep.subr.bf16.mxu0 0
        %377 = vmatpush1.bf16.msra.mxu0 %v316
        %378 = vmatprep.subr.bf16.mxu0 0
        %379 = vmatpush2.bf16.msra.mxu0 0
        %380 = vmatprep.subr.bf16.mxu0 0
        %381 = vmatpush2.bf16.msra.mxu0 0
        %382 = vmatprep.subr.bf16.mxu0 0
        %383 = vmatpush2.bf16.msra.mxu0 0
        %384 = vmatprep.subr.bf16.mxu0 0
        %385 = vmatpush2.bf16.msra.mxu0 0
        %386 = vmatprep.subr.bf16.mxu0 0
        %387 = vmatpush2.bf16.msra.mxu0 0
        %388 = vmatprep.subr.bf16.mxu0 0
        %389 = vmatpush2.bf16.msra.mxu0 0
        %390 = vmatprep.subr.bf16.mxu0 0
        %391 = vmatpush2.bf16.msra.mxu0 0
        %392 = vmatprep.subr.bf16.mxu0 0
        %393 = vmatpush2.bf16.msra.mxu0 0
        %394 = vmatprep.mubr.bf16.mxu0 0
        %395 = vmatmul.mubr.bf16.gmra.mxu0 %v319
        %v396 = vpop.f32.mrf.mxu0
        %v397 = vadd.f32 0.0, %v396
        %v398 = vpop.f32.mrf.mxu0
        %v399 = vpop.f32.mrf.mxu0
        %v400 = vpop.f32.mrf.mxu0
        %401 = vdwg.mxu0
        %s402 = scalar_lea.vmem %s214, 8 [#allocation8]
        %403 = vst [vmem:[%s402] sm:$0xff] %v397
        %404 = vmatprep.subr.bf16.mxu0 0
        %405 = vmatpush1.bf16.msra.mxu0 0
        %406 = vmatprep.subr.bf16.mxu0 0
        %407 = vmatpush1.bf16.msra.mxu0 0
        %408 = vmatprep.subr.bf16.mxu0 0
        %409 = vmatpush1.bf16.msra.mxu0 0
        %410 = vmatprep.subr.bf16.mxu0 0
        %411 = vmatpush1.bf16.msra.mxu0 0
        %412 = vmatprep.subr.bf16.mxu0 0
        %413 = vmatpush1.bf16.msra.mxu0 0
        %414 = vmatprep.subr.bf16.mxu0 0
        %415 = vmatpush1.bf16.msra.mxu0 0
        %416 = vmatprep.subr.bf16.mxu0 0
        %417 = vmatpush1.bf16.msra.mxu0 0
        %418 = vmatprep.subr.bf16.mxu0 0
        %419 = vmatpush1.bf16.msra.mxu0 %v317
        %420 = vmatprep.subr.bf16.mxu0 0
        %421 = vmatpush2.bf16.msra.mxu0 0
        %422 = vmatprep.subr.bf16.mxu0 0
        %423 = vmatpush2.bf16.msra.mxu0 0
        %424 = vmatprep.subr.bf16.mxu0 0
        %425 = vmatpush2.bf16.msra.mxu0 0
        %426 = vmatprep.subr.bf16.mxu0 0
        %427 = vmatpush2.bf16.msra.mxu0 0
        %428 = vmatprep.subr.bf16.mxu0 0
        %429 = vmatpush2.bf16.msra.mxu0 0
        %430 = vmatprep.subr.bf16.mxu0 0
        %431 = vmatpush2.bf16.msra.mxu0 0
        %432 = vmatprep.subr.bf16.mxu0 0
        %433 = vmatpush2.bf16.msra.mxu0 0
        %434 = vmatprep.subr.bf16.mxu0 0
        %435 = vmatpush2.bf16.msra.mxu0 0
        %436 = vmatprep.mubr.bf16.mxu0 0
        %437 = vmatmul.mubr.bf16.gmra.mxu0 %v319
        %v438 = vpop.f32.mrf.mxu0
        %v439 = vadd.f32 0.0, %v438
        %v440 = vpop.f32.mrf.mxu0
        %v441 = vpop.f32.mrf.mxu0
        %v442 = vpop.f32.mrf.mxu0
        %443 = vdwg.mxu0
        %s444 = scalar_lea.vmem %s214, 16 [#allocation8]
        %445 = vst [vmem:[%s444] sm:$0xff] %v439
        %s446 = sand.u32 %s95, 1
        %s447 = scalar_lea.sflag [#allocation4], %s446
        %s448 = sand.u32 %s95, 1
        %s449 = smul.addr %s448, 24
        %s450 = scalar_lea.vmem [#allocation8], %s449
        // Predicated region
        $region45: #{tpu_custom_call.1} parent=31 // pred_check
          %p451 = pneg %p105
        $region46: #{tpu_custom_call.1} parent=31 // pred_check_branch
          %453 = sbr.rel (%p451) target = $region48
        $region47: #{tpu_custom_call.1} parent=31 // pred_region
          %s454 = smul.u32 3, %s19
          %s456 = ssub.s32 384, 384
          %457 = vsyncadd %s447, %s456
          %s458 = smul.addr %s454, 128
          %s459 = scalar_lea.hbm %s3, %s458
          %s460 = sshll.u32 %s450, 4
          %s461 = int_to_ptr.vmem [resolvable:$true] %s460
          %466 = dma.vmem_to_hbm [thread:$0]  %s461, 384, %s459, %s447, 128, 128, 8
        $region48: #{tpu_custom_call.1} parent=31 // pred_fallthru
          _
      $region32: #{tpu_custom_call.1} parent=5 // pred_fallthru
        _
      %p467 = scmp.le.s32.totalorder 2, %s14
      // Predicated region
      $region49: #{tpu_custom_call.1} parent=5 // pred_check
        %p468 = pneg %p467
      $region50: #{tpu_custom_call.1} parent=5 // pred_check_branch
        %470 = sbr.rel (%p468) target = $region52
      $region51: #{tpu_custom_call.1} parent=5 // pred_region
        %s471 = ssub.s32 %s14, 2
        // Predicated region
        $region53: #{tpu_custom_call.1} parent=51 // pred_check
          %p472 = pneg %p111
        $region54: #{tpu_custom_call.1} parent=51 // pred_check_branch
          %474 = sbr.rel (%p472) target = $region56
        $region55: #{tpu_custom_call.1} parent=51 // pred_region
          %s475 = sand.u32 %s96, 1
          %s476 = scalar_lea.sflag [#allocation4], %s475
          %s477 = sand.u32 %s96, 1
          %s478 = smul.addr %s477, 24
          %s479 = scalar_lea.vmem [#allocation8], %s478
          %480 = dma.done %s476, 384
        $region56: #{tpu_custom_call.1} parent=51 // pred_fallthru
          _
      $region52: #{tpu_custom_call.1} parent=5 // pred_fallthru
        _
    $region6: #{tpu_custom_call.1} parent=1 // loop_footer
      %s18 = sadd.s32 1, %s14
    $region7: #{tpu_custom_call.1} parent=1 // loop_footer_branch
      %13 = sbr.rel target = $region3
    $region8: #{tpu_custom_call.1} parent=1 // loop_exit
      _
    %481 = vsyncpa [#allocation3], 1
    %s482 = scalar_lea.sflag [#allocation3], 1
    %483 = vsyncpa %s482, 1
    %484 = vsyncpa [#allocation6], 1
    %485 = vsyncpa [#allocation4], 1
    %s486 = scalar_lea.sflag [#allocation4], 1
    %487 = vsyncpa %s486, 1

</llo_original>
